<compile_context>
chip_gen: v7x
topology: tpu7x:2x2x1
jax: 0.10.0
libtpu: 0.0.40
codegen_flags: <defaults>
</compile_context>

<pallas_src>
import functools

import jax
import jax.numpy as jnp
from jax.experimental import pallas as pl
from jax.experimental.pallas import tpu as pltpu


# ---------------------------------------------------------------------------
# Fused attention kernel: grid = (batch, heads)
# ---------------------------------------------------------------------------
def _attention_kernel(x_ref, wqkv_ref, wo_ref, o_ref, acc_ref, *, dim_head):
    """One head of one batch element per grid step.

    x_ref:    (1, N, dim)      bf16 (revisited across the head axis)
    wqkv_ref: (1, dim, 3*D)    bf16, current head's fused [Q|K|V] weights,
                               softmax scale folded into the Q columns
    wo_ref:   (1, D, out_dim)  bf16, current head's slice of the out-proj
    o_ref:    (1, N, out_dim)  f32
    acc_ref:  (N, out_dim)     f32 VMEM scratch (sum over heads)
    """
    h = pl.program_id(1)

    @pl.when(h == 0)
    def _():
        acc_ref[...] = jnp.zeros_like(acc_ref)

    x = x_ref[0]                                              # (N, dim) bf16

    # Fused per-head QKV projection: one 3*D-lane matmul, one cast.
    qkv = jnp.dot(x, wqkv_ref[0],
                  preferred_element_type=jnp.float32).astype(jnp.bfloat16)
    q = qkv[:, :dim_head]
    k = qkv[:, dim_head:2 * dim_head]
    v = qkv[:, 2 * dim_head:]

    # s = (q * scale) @ k^T   (scale already folded into the Q weights)
    s = jax.lax.dot_general(q, k, (((1,), (1,)), ((), ())),
                            preferred_element_type=jnp.float32)   # (N, N) f32

    # Numerically stable softmax in f32 (approx reciprocal goes to the EUP;
    # ~1e-3 rel. error, well inside the 5e-2 tolerance).
    s = s - jnp.max(s, axis=-1, keepdims=True)
    p = jnp.exp(s)
    p = p * pl.reciprocal(jnp.sum(p, axis=-1, keepdims=True), approx=True)

    o_h = jnp.dot(p.astype(jnp.bfloat16), v,
                  preferred_element_type=jnp.float32).astype(jnp.bfloat16)

    # Output projection applied per head and summed (== concat(o_h) @ Wout).
    acc_ref[...] += jnp.dot(o_h, wo_ref[0],
                            preferred_element_type=jnp.float32)

    @pl.when(h == pl.num_programs(1) - 1)
    def _():
        o_ref[0] = acc_ref[...].astype(o_ref.dtype)


def _attention_kernel_noproj(x_ref, wqkv_ref, o_ref, *, dim_head):
    """project_out == False path (heads == 1, dim_head == dim): no Wout."""
    x = x_ref[0]
    qkv = jnp.dot(x, wqkv_ref[0],
                  preferred_element_type=jnp.float32).astype(jnp.bfloat16)
    q = qkv[:, :dim_head]
    k = qkv[:, dim_head:2 * dim_head]
    v = qkv[:, 2 * dim_head:]
    s = jax.lax.dot_general(q, k, (((1,), (1,)), ((), ())),
                            preferred_element_type=jnp.float32)
    s = s - jnp.max(s, axis=-1, keepdims=True)
    p = jnp.exp(s)
    p = p * pl.reciprocal(jnp.sum(p, axis=-1, keepdims=True), approx=True)
    o_ref[0] = jnp.dot(p.astype(jnp.bfloat16), v,
                       preferred_element_type=jnp.float32).astype(o_ref.dtype)


# ---------------------------------------------------------------------------
# Host-side weight preparation (done once, outside the forward path)
# ---------------------------------------------------------------------------
def prepare_params(w_qkv, w_out, heads, dim_head):
    """PyTorch-layout Linear weights -> kernel layout.

    w_qkv: (3*inner, dim)  (nn.Linear(dim, 3*inner, bias=False).weight)
    w_out: (dim, inner) or None (project_out == False -> Identity)

    Returns:
      wqkv: (H, dim, 3*D) bf16, per-head [Q|K|V] columns, Q pre-scaled
      wo:   (H, D, dim) bf16, or None
    """
    inner = heads * dim_head
    dim = w_qkv.shape[1]
    scale = dim_head ** (-0.5)

    def per_head(w):                      # (inner, dim) -> (H, dim, D)
        return jnp.transpose(w.reshape(heads, dim_head, dim), (0, 2, 1))

    wq = per_head(w_qkv[:inner]) * scale          # fold softmax scale into Q
    wk = per_head(w_qkv[inner:2 * inner])
    wv = per_head(w_qkv[2 * inner:])
    wqkv = jnp.concatenate([wq, wk, wv], axis=-1).astype(jnp.bfloat16)

    if w_out is None:
        wo = None                                  # Identity: no eye-matmul
    else:                                          # (dim, inner) -> (H, D, dim)
        wo = jnp.transpose(w_out, (1, 0)).reshape(
            heads, dim_head, w_out.shape[0]).astype(jnp.bfloat16)
    return wqkv, wo


# ---------------------------------------------------------------------------
# Forward wrapper
# ---------------------------------------------------------------------------
@jax.jit
def attention_forward(x, wqkv, wo):
    B, N, dim = x.shape
    heads, _, three_d = wqkv.shape
    dim_head = three_d // 3
    x_bf16 = x.astype(jnp.bfloat16)

    if wo is not None:
        out_dim = wo.shape[-1]
        kernel = functools.partial(_attention_kernel, dim_head=dim_head)
        return pl.pallas_call(
            kernel,
            out_shape=jax.ShapeDtypeStruct((B, N, out_dim), jnp.float32),
            grid_spec=pltpu.PrefetchScalarGridSpec(
                num_scalar_prefetch=0,
                grid=(B, heads),
                in_specs=[
                    pl.BlockSpec((1, N, dim), lambda b, h: (b, 0, 0)),
                    pl.BlockSpec((1, dim, three_d), lambda b, h: (h, 0, 0)),
                    pl.BlockSpec((1, dim_head, out_dim), lambda b, h: (h, 0, 0)),
                ],
                out_specs=pl.BlockSpec((1, N, out_dim), lambda b, h: (b, 0, 0)),
                scratch_shapes=[pltpu.VMEM((N, out_dim), jnp.float32)],
            ),
            compiler_params=pltpu.CompilerParams(
                dimension_semantics=("parallel", "arbitrary"),
                vmem_limit_bytes=32 * 1024 * 1024),
        )(x_bf16, wqkv, wo)

    # project_out == False  (heads == 1, dim_head == dim)
    out_dim = dim_head
    kernel = functools.partial(_attention_kernel_noproj, dim_head=dim_head)
    return pl.pallas_call(
        kernel,
        out_shape=jax.ShapeDtypeStruct((B, N, out_dim), jnp.float32),
        grid_spec=pltpu.PrefetchScalarGridSpec(
            num_scalar_prefetch=0,
            grid=(B,),
            in_specs=[
                pl.BlockSpec((1, N, dim), lambda b: (b, 0, 0)),
                pl.BlockSpec((1, dim, three_d), lambda b: (0, 0, 0)),
            ],
            out_specs=pl.BlockSpec((1, N, out_dim), lambda b: (b, 0, 0)),
        ),
        compiler_params=pltpu.CompilerParams(
            dimension_semantics=("parallel",),
            vmem_limit_bytes=32 * 1024 * 1024),
    )(x_bf16, wqkv)


# ---------------------------------------------------------------------------
# Pure-JAX reference (matches the PyTorch module, eval mode)
# ---------------------------------------------------------------------------
def attention_reference(x, w_qkv, w_out, heads, dim_head):
    B, N, _ = x.shape
    inner = heads * dim_head
    scale = dim_head ** (-0.5)
    qkv = x @ w_qkv.T
    q, k, v = jnp.split(qkv, 3, axis=-1)

    def to_heads(t):
        return jnp.transpose(t.reshape(B, N, heads, dim_head), (0, 2, 1, 3))

    q, k, v = map(to_heads, (q, k, v))
    dots = jnp.einsum("bhnd,bhmd->bhnm", q, k) * scale
    attn = jax.nn.softmax(dots, axis=-1)
    out = jnp.einsum("bhnm,bhmd->bhnd", attn, v)
    out = jnp.transpose(out, (0, 2, 1, 3)).reshape(B, N, inner)
    if w_out is not None:
        out = out @ w_out.T
    return out


if __name__ == "__main__":
    key = jax.random.PRNGKey(0)
    B, N, dim = 2, 8, 32                 # batch=2, seq=8, hidden=32
    heads, dim_head = 8, 64              # nn.Module defaults
    inner = heads * dim_head
    project_out = not (heads == 1 and dim_head == dim)

    kx, kqkv, kout = jax.random.split(key, 3)
    x = jax.random.normal(kx, (B, N, dim), jnp.float32)
    # PyTorch nn.Linear default init: U(-1/sqrt(fan_in), 1/sqrt(fan_in))
    b_qkv = 1.0 / (dim ** 0.5)
    w_qkv = jax.random.uniform(kqkv, (3 * inner, dim), jnp.float32, -b_qkv, b_qkv)
    if project_out:
        b_out = 1.0 / (inner ** 0.5)
        w_out = jax.random.uniform(kout, (dim, inner), jnp.float32, -b_out, b_out)
    else:
        w_out = None

    wqkv, wo = prepare_params(w_qkv, w_out, heads, dim_head)
    out = attention_forward(x, wqkv, wo)
    out = jax.block_until_ready(out)

    expected = (B, N, dim if project_out else inner)
    assert out.shape == expected, (out.shape, expected)
    assert jnp.all(jnp.isfinite(out))

    ref = attention_reference(x, w_qkv, w_out, heads, dim_head)
    max_err = float(jnp.max(jnp.abs(out - ref)))
    assert max_err < 5e-2, f"max abs err {max_err}"

    print("KERNEL_OK")
</pallas_src>

<mosaic_0001>
module attributes {stable_mosaic.version = 11 : i64} {
  func.func @_attention_kernel(%arg0: i32, %arg1: i32, %arg2: memref<1x8x32xbf16, #tpu.memory_space<vmem>>, %arg3: memref<1x32x192xbf16, #tpu.memory_space<vmem>>, %arg4: memref<1x64x32xbf16, #tpu.memory_space<vmem>>, %arg5: memref<1x8x32xf32, #tpu.memory_space<vmem>>, %arg6: memref<8x32xf32, #tpu.memory_space<vmem>>) attributes {dimension_semantics = [#tpu.dimension_semantics<parallel>, #tpu.dimension_semantics<arbitrary>], iteration_bounds = array<i64: 2, 8>, scalar_prefetch = 0 : i64, scratch_operands = 1 : i64, tpu.core_type = #tpu.core_type<tc>, window_params = [{transform_indices = @transform_0, window_bounds = array<i64: 1, 8, 32>}, {transform_indices = @transform_1, window_bounds = array<i64: 1, 32, 192>}, {transform_indices = @transform_2, window_bounds = array<i64: 1, 64, 32>}, {transform_indices = @transform_3, window_bounds = array<i64: 1, 8, 32>}]} {
    %c0_i32 = arith.constant 0 : i32
    %0 = arith.cmpi eq, %arg1, %c0_i32 : i32
    %1 = arith.extui %0 : i1 to i32
    %c0_i32_0 = arith.constant 0 : i32
    %2 = arith.cmpi ne, %1, %c0_i32_0 : i32
    scf.if %2 {
      %cst_19 = arith.constant 0.000000e+00 : f32
      %35 = vector.broadcast %cst_19 : f32 to vector<8x32xf32>
      %c0_20 = arith.constant 0 : index
      %c0_21 = arith.constant 0 : index
      %36 = vector.load %arg6[%c0_20, %c0_21] : memref<8x32xf32, #tpu.memory_space<vmem>>, vector<8x32xf32>
      tpu.vector_store %arg6[%c0_20, %c0_21], %35 {strides = array<i32>} : memref<8x32xf32, #tpu.memory_space<vmem>>, vector<8x32xf32>,
    } else {
    }
    %c0 = arith.constant 0 : index
    %c0_1 = arith.constant 0 : index
    %c0_2 = arith.constant 0 : index
    %3 = vector.load %arg2[%c0, %c0_1, %c0_2] : memref<1x8x32xbf16, #tpu.memory_space<vmem>>, vector<1x8x32xbf16>
    %4 = vector.shape_cast %3 : vector<1x8x32xbf16> to vector<8x32xbf16>
    %c0_3 = arith.constant 0 : index
    %c0_4 = arith.constant 0 : index
    %c0_5 = arith.constant 0 : index
    %5 = vector.load %arg3[%c0_3, %c0_4, %c0_5] : memref<1x32x192xbf16, #tpu.memory_space<vmem>>, vector<1x32x192xbf16>
    %6 = vector.shape_cast %5 : vector<1x32x192xbf16> to vector<32x192xbf16>
    %cst = arith.constant dense<0.000000e+00> : vector<8x192xf32>
    %7 = tpu.matmul %4, %6, %cst {dimension_numbers = #tpu.dot_dimension_numbers<[1], [0], [0], [1], [0, 0, 1, 1], [], []>} : vector<8x32xbf16>, vector<32x192xbf16>, vector<8x192xf32> -> vector<8x192xf32>
    %8 = arith.truncf %7 : vector<8x192xf32> to vector<8x192xbf16>
    %9 = vector.extract_strided_slice %8 {offsets = [0, 0], sizes = [8, 64], strides = [1, 1]} : vector<8x192xbf16> to vector<8x64xbf16>
    %10 = vector.extract_strided_slice %8 {offsets = [0, 64], sizes = [8, 64], strides = [1, 1]} : vector<8x192xbf16> to vector<8x64xbf16>
    %11 = vector.extract_strided_slice %8 {offsets = [0, 128], sizes = [8, 64], strides = [1, 1]} : vector<8x192xbf16> to vector<8x64xbf16>
    %cst_6 = arith.constant dense<0.000000e+00> : vector<8x8xf32>
    %12 = tpu.matmul %9, %10, %cst_6 {dimension_numbers = #tpu.dot_dimension_numbers<[1], [1], [0], [0], [0, 0, 1, 0], [], []>} : vector<8x64xbf16>, vector<8x64xbf16>, vector<8x8xf32> -> vector<8x8xf32>
    %cst_7 = arith.constant dense<0xFF800000> : vector<8xf32>
    %13 = vector.multi_reduction <maximumf>, %12, %cst_7 [1] : vector<8x8xf32> to vector<8xf32>
    %14 = vector.shape_cast %13 : vector<8xf32> to vector<8x1xf32>
    %15 = vector.broadcast %14 : vector<8x1xf32> to vector<8x8xf32>
    %16 = arith.subf %12, %15 : vector<8x8xf32>
    %17 = math.exp %16 : vector<8x8xf32>
    %cst_8 = arith.constant dense<0.000000e+00> : vector<8xf32>
    %18 = vector.multi_reduction <add>, %17, %cst_8 [1] : vector<8x8xf32> to vector<8xf32>
    %19 = vector.shape_cast %18 : vector<8xf32> to vector<8x1xf32>
    %20 = tpu.reciprocal %19 {approx = true} : vector<8x1xf32> -> vector<8x1xf32>
    %21 = vector.broadcast %20 : vector<8x1xf32> to vector<8x8xf32>
    %22 = arith.mulf %17, %21 : vector<8x8xf32>
    %23 = arith.truncf %22 : vector<8x8xf32> to vector<8x8xbf16>
    %cst_9 = arith.constant dense<0.000000e+00> : vector<8x64xf32>
    %24 = tpu.matmul %23, %11, %cst_9 {dimension_numbers = #tpu.dot_dimension_numbers<[1], [0], [0], [1], [0, 0, 1, 1], [], []>} : vector<8x8xbf16>, vector<8x64xbf16>, vector<8x64xf32> -> vector<8x64xf32>
    %25 = arith.truncf %24 : vector<8x64xf32> to vector<8x64xbf16>
    %c0_10 = arith.constant 0 : index
    %c0_11 = arith.constant 0 : index
    %26 = vector.load %arg6[%c0_10, %c0_11] : memref<8x32xf32, #tpu.memory_space<vmem>>, vector<8x32xf32>
    %c0_12 = arith.constant 0 : index
    %c0_13 = arith.constant 0 : index
    %c0_14 = arith.constant 0 : index
    %27 = vector.load %arg4[%c0_12, %c0_13, %c0_14] : memref<1x64x32xbf16, #tpu.memory_space<vmem>>, vector<1x64x32xbf16>
    %28 = vector.shape_cast %27 : vector<1x64x32xbf16> to vector<64x32xbf16>
    %cst_15 = arith.constant dense<0.000000e+00> : vector<8x32xf32>
    %29 = tpu.matmul %25, %28, %cst_15 {dimension_numbers = #tpu.dot_dimension_numbers<[1], [0], [0], [1], [0, 0, 1, 1], [], []>} : vector<8x64xbf16>, vector<64x32xbf16>, vector<8x32xf32> -> vector<8x32xf32>
    %30 = arith.addf %26, %29 : vector<8x32xf32>
    %c0_16 = arith.constant 0 : index
    %c0_17 = arith.constant 0 : index
    %31 = vector.load %arg6[%c0_16, %c0_17] : memref<8x32xf32, #tpu.memory_space<vmem>>, vector<8x32xf32>
    tpu.vector_store %arg6[%c0_16, %c0_17], %30 {strides = array<i32>} : memref<8x32xf32, #tpu.memory_space<vmem>>, vector<8x32xf32>,
    %c7_i32 = arith.constant 7 : i32
    %32 = arith.cmpi eq, %arg1, %c7_i32 : i32
    %33 = arith.extui %32 : i1 to i32
    %c0_i32_18 = arith.constant 0 : i32
    %34 = arith.cmpi ne, %33, %c0_i32_18 : i32
    scf.if %34 {
      %c0_19 = arith.constant 0 : index
      %c0_20 = arith.constant 0 : index
      %35 = vector.load %arg6[%c0_19, %c0_20] : memref<8x32xf32, #tpu.memory_space<vmem>>, vector<8x32xf32>
      %c0_21 = arith.constant 0 : index
      %c0_22 = arith.constant 0 : index
      %c0_23 = arith.constant 0 : index
      %36 = vector.load %arg5[%c0_21, %c0_22, %c0_23] : memref<1x8x32xf32, #tpu.memory_space<vmem>>, vector<1x8x32xf32>
      %37 = vector.shape_cast %36 : vector<1x8x32xf32> to vector<8x32xf32>
      %38 = vector.shape_cast %35 : vector<8x32xf32> to vector<1x8x32xf32>
      tpu.vector_store %arg5[%c0_21, %c0_22, %c0_23], %38 {strides = array<i32>} : memref<1x8x32xf32, #tpu.memory_space<vmem>>, vector<1x8x32xf32>,
    } else {
    }
    return
  }
  func.func @transform_0(%arg0: i32, %arg1: i32) -> (i32, i32, i32) {
    %c0_i32 = arith.constant 0 : i32
    %c0_i32_0 = arith.constant 0 : i32
    %c0_i32_1 = arith.constant 0 : i32
    return %arg0, %c0_i32, %c0_i32_0 : i32, i32, i32
  }
  func.func @transform_1(%arg0: i32, %arg1: i32) -> (i32, i32, i32) {
    %c0_i32 = arith.constant 0 : i32
    %c0_i32_0 = arith.constant 0 : i32
    %c0_i32_1 = arith.constant 0 : i32
    return %arg1, %c0_i32, %c0_i32_0 : i32, i32, i32
  }
  func.func @transform_2(%arg0: i32, %arg1: i32) -> (i32, i32, i32) {
    %c0_i32 = arith.constant 0 : i32
    %c0_i32_0 = arith.constant 0 : i32
    %c0_i32_1 = arith.constant 0 : i32
    return %arg1, %c0_i32, %c0_i32_0 : i32, i32, i32
  }
  func.func @transform_3(%arg0: i32, %arg1: i32) -> (i32, i32, i32) {
    %c0_i32 = arith.constant 0 : i32
    %c0_i32_0 = arith.constant 0 : i32
    %c0_i32_1 = arith.constant 0 : i32
    return %arg0, %c0_i32, %c0_i32_0 : i32, i32, i32
  }
}

</mosaic_0001>

<llo_original>
// kernel: attention_forward.1
$region0: #{attention_forward.1}
  #allocation0 [shape = 'u32[]', space=smem, size = 0x4, offset = 0x4, fixed_abs, tag = 'smem constant byte address 0x4 - core index']
  #allocation1 [shape = 'u32[144,128]{1,0:T(1,128)}', space=vmem, size = 0x12000, scoped, tag = 'internal scratch']
  #allocation2 [shape = 'f32[8,32]{1,0:T(8,128)}', space=vmem, size = 0x1000, scoped, tag = 'scratch operand']
  %s0 = inlined_call_operand.vmem [shape: bf16[2,8,32], index: 0, kind: input, shape index: {}]
  %s1 = inlined_call_operand.vmem [shape: bf16[8,32,192], index: 1, kind: input, shape index: {}]
  %s2 = inlined_call_operand.vmem [shape: bf16[8,64,32], index: 2, kind: input, shape index: {}]
  %s3 = inlined_call_operand.hbm [shape: f32[2,8,32], index: 3, kind: output, shape index: {}]
  %s4 = sld [smem:[#allocation0]]
  $region53: #{attention_forward.1} parent=0
    _
  %s6 = ssub.s32 1, %s4
  %s7 = scalar_select 0, %s6, %s4
  $region1: #{attention_forward.1} parent=0
    #allocation3 [shape = 'u8[8192]{0}', space=vmem, size = 0x2000, scoped, tag = 'output window, operand 0']
    #allocation4 [shape = 's32[2]{0}', space=sflag, size = 0x8, scoped, tag = 'scoped memory for attention_forward.1']
    %8 = vsyncpa [#allocation4], 0
    %s9 = scalar_lea.sflag [#allocation4], 1
    %10 = vsyncpa %s9, 0
    loop: start=0, step=1, limit=18
    $region2: #{attention_forward.1} parent=1 // loop_pre_header
      _
    $region3: #{attention_forward.1} parent=1 // loop_header
      %s12 = sphi 0, %s16
      %p13 = scmp.ge.s32.totalorder %s12, 18
      %s19 = sphi 0, %s31
      %s20 = sphi 0, %s27
      %s21 = sphi 0, %s19
      %s22 = sphi 0, %s20
      %s23 = sphi 0, %s21
      %s24 = sphi 0, %s22
      %s34 = sphi 0, %s36
      %s37 = sphi 0, %s34
      %s38 = sphi 0, %s37
      %s54 = sphi 0, %s38
      %s60 = sphi 0, %s62
      %s63 = sphi 0, %s60
      %s64 = sphi 0, %s63
      %s80 = sphi 0, %s64
      %s86 = sphi 0, %s88
      %s89 = sphi 0, %s86
      %s90 = sphi 0, %s89
      %s106 = sphi 0, %s90
      %s112 = sphi 0, %s114
      %s115 = sphi 0, %s112
      %s116 = sphi 0, %s115
      %s132 = sphi 0, %s116
    $region4: #{attention_forward.1} parent=1 // loop_header_branch
      %15 = sbr.rel (%p13) target = $region8
    $region5: #{attention_forward.1} parent=1 // loop_body
      %s17 = ssub.s32 %s12, 1
      %s18 = ssub.s32 %s12, 2
      %s25 = sadd.s32 1, %s20
      %p26 = scmp.ge.s32.totalorder %s25, 8
      %s27 = scalar_select %p26, 0, %s25
      %s28 = sadd.s32 1, %s19
      %s29 = scalar_select %p26, %s28, %s19
      %p30 = scmp.ge.s32.totalorder %s29, 2
      %s31 = scalar_select %p30, 0, %s29
      %s32 = ssub.s32 %s19, %s31
      %p33 = scmp.eq.s32.totalorder %s32, 0
      %s35 = sadd.s32 %s34, 1
      %s36 = scalar_select %p33, %s34, %s35
      %p39 = pneg %p33
      %p40 = scmp.eq.s32.totalorder %s12, 15
      %p41 = por %p39, %p40
      %p42 = scmp.ne.s32.totalorder %s34, %s37
      %p43 = scmp.eq.s32.totalorder %s12, 0
      %p44 = por %p42, %p43
      %p45 = scmp.ne.s32.totalorder %s34, %s37
      %p46 = scmp.eq.s32.totalorder %s17, 15
      %p47 = por %p45, %p46
      %p48 = scmp.ne.s32.totalorder %s37, %s38
      %p49 = scmp.eq.s32.totalorder %s17, 0
      %p50 = por %p48, %p49
      %p51 = scmp.ne.s32.totalorder %s37, %s38
      %p52 = scmp.eq.s32.totalorder %s18, 15
      %p53 = por %p51, %p52
      %p55 = scmp.ne.s32.totalorder %s38, %s54
      %p56 = scmp.eq.s32.totalorder %s18, 0
      %p57 = por %p55, %p56
      %s58 = ssub.s32 %s20, %s27
      %p59 = scmp.eq.s32.totalorder %s58, 0
      %s61 = sadd.s32 %s60, 1
      %s62 = scalar_select %p59, %s60, %s61
      %p65 = pneg %p59
      %p66 = scmp.eq.s32.totalorder %s12, 15
      %p67 = por %p65, %p66
      %p68 = scmp.ne.s32.totalorder %s60, %s63
      %p69 = scmp.eq.s32.totalorder %s12, 0
      %p70 = por %p68, %p69
      %p71 = scmp.ne.s32.totalorder %s60, %s63
      %p72 = scmp.eq.s32.totalorder %s17, 15
      %p73 = por %p71, %p72
      %p74 = scmp.ne.s32.totalorder %s63, %s64
      %p75 = scmp.eq.s32.totalorder %s17, 0
      %p76 = por %p74, %p75
      %p77 = scmp.ne.s32.totalorder %s63, %s64
      %p78 = scmp.eq.s32.totalorder %s18, 15
      %p79 = por %p77, %p78
      %p81 = scmp.ne.s32.totalorder %s64, %s80
      %p82 = scmp.eq.s32.totalorder %s18, 0
      %p83 = por %p81, %p82
      %s84 = ssub.s32 %s20, %s27
      %p85 = scmp.eq.s32.totalorder %s84, 0
      %s87 = sadd.s32 %s86, 1
      %s88 = scalar_select %p85, %s86, %s87
      %p91 = pneg %p85
      %p92 = scmp.eq.s32.totalorder %s12, 15
      %p93 = por %p91, %p92
      %p94 = scmp.ne.s32.totalorder %s86, %s89
      %p95 = scmp.eq.s32.totalorder %s12, 0
      %p96 = por %p94, %p95
      %p97 = scmp.ne.s32.totalorder %s86, %s89
      %p98 = scmp.eq.s32.totalorder %s17, 15
      %p99 = por %p97, %p98
      %p100 = scmp.ne.s32.totalorder %s89, %s90
      %p101 = scmp.eq.s32.totalorder %s17, 0
      %p102 = por %p100, %p101
      %p103 = scmp.ne.s32.totalorder %s89, %s90
      %p104 = scmp.eq.s32.totalorder %s18, 15
      %p105 = por %p103, %p104
      %p107 = scmp.ne.s32.totalorder %s90, %s106
      %p108 = scmp.eq.s32.totalorder %s18, 0
      %p109 = por %p107, %p108
      %s110 = ssub.s32 %s19, %s31
      %p111 = scmp.eq.s32.totalorder %s110, 0
      %s113 = sadd.s32 %s112, 1
      %s114 = scalar_select %p111, %s112, %s113
      %p117 = pneg %p111
      %p118 = scmp.eq.s32.totalorder %s12, 15
      %p119 = por %p117, %p118
      %p120 = scmp.ne.s32.totalorder %s112, %s115
      %p121 = scmp.eq.s32.totalorder %s12, 0
      %p122 = por %p120, %p121
      %p123 = scmp.ne.s32.totalorder %s112, %s115
      %p124 = scmp.eq.s32.totalorder %s17, 15
      %p125 = por %p123, %p124
      %p126 = scmp.ne.s32.totalorder %s115, %s116
      %p127 = scmp.eq.s32.totalorder %s17, 0
      %p128 = por %p126, %p127
      %p129 = scmp.ne.s32.totalorder %s115, %s116
      %p130 = scmp.eq.s32.totalorder %s18, 15
      %p131 = por %p129, %p130
      %p133 = scmp.ne.s32.totalorder %s116, %s132
      %p134 = scmp.eq.s32.totalorder %s18, 0
      %p135 = por %p133, %p134
      %p136 = scmp.le.s32.totalorder 1, %s12
      %p137 = scmp.lt.s32.totalorder %s12, 17
      %p138 = pnand %p136, %p137
      %p139 = pneg %p138
      // Predicated region
      $region9: #{attention_forward.1} parent=5 // pred_check
        _
      $region10: #{attention_forward.1} parent=5 // pred_check_branch
        %141 = sbr.rel (%p138) target = $region12
      $region11: #{attention_forward.1} parent=5 // pred_region
        %s142 = ssub.s32 %s12, 1
      $region12: #{attention_forward.1} parent=5 // pred_fallthru
        _
      %p143 = scmp.lt.s32.totalorder %s12, 16
      // Predicated region
      $region13: #{attention_forward.1} parent=5 // pred_check
        %p144 = pneg %p143
      $region14: #{attention_forward.1} parent=5 // pred_check_branch
        %146 = sbr.rel (%p144) target = $region16
      $region15: #{attention_forward.1} parent=5 // pred_region
        // Predicated region
        $region17: #{attention_forward.1} parent=15 // pred_check
          %p147 = pneg %p44
        $region18: #{attention_forward.1} parent=15 // pred_check_branch
          %149 = sbr.rel (%p147) target = $region20
        $region19: #{attention_forward.1} parent=15 // pred_region
          %p150 = scmp.lt.s32.totalorder %s19, 1
          %s151 = scalar_select %p150, %s19, 1
          %s152 = smul.addr %s151, 4
          %s153 = scalar_lea.vmem %s0, %s152
        $region20: #{attention_forward.1} parent=15 // pred_fallthru
          _
        // Predicated region
        $region21: #{attention_forward.1} parent=15 // pred_check
          %p154 = pneg %p70
        $region22: #{attention_forward.1} parent=15 // pred_check_branch
          %156 = sbr.rel (%p154) target = $region24
        $region23: #{attention_forward.1} parent=15 // pred_region
          %p157 = scmp.lt.s32.totalorder %s20, 7
          %s158 = scalar_select %p157, %s20, 7
          %s159 = smul.addr %s158, 8
          %s160 = smul.addr %s159, 4
          %s161 = scalar_lea.vmem %s1, %s160
        $region24: #{attention_forward.1} parent=15 // pred_fallthru
          _
        // Predicated region
        $region25: #{attention_forward.1} parent=15 // pred_check
          %p162 = pneg %p96
        $region26: #{attention_forward.1} parent=15 // pred_check_branch
          %164 = sbr.rel (%p162) target = $region28
        $region27: #{attention_forward.1} parent=15 // pred_region
          %p165 = scmp.lt.s32.totalorder %s20, 7
          %s166 = scalar_select %p165, %s20, 7
          %s167 = smul.addr %s166, 8
          %s168 = smul.addr %s167, 4
          %s169 = scalar_lea.vmem %s2, %s168
        $region28: #{attention_forward.1} parent=15 // pred_fallthru
          _
      $region16: #{attention_forward.1} parent=5 // pred_fallthru
        _
      %p170 = scmp.le.s32.totalorder 1, %s12
      %p171 = scmp.lt.s32.totalorder %s12, 17
      %p172 = pnand %p170, %p171
      %p173 = pneg %p172
      // Predicated region
      $region29: #{attention_forward.1} parent=5 // pred_check
        _
      $region30: #{attention_forward.1} parent=5 // pred_check_branch
        %175 = sbr.rel (%p172) target = $region32
      $region31: #{attention_forward.1} parent=5 // pred_region
        %s176 = ssub.s32 %s12, 1
        %p177 = scmp.lt.s32.totalorder %s21, 1
        %s178 = scalar_select %p177, %s21, 1
        %s179 = smul.addr %s178, 4
        %s180 = scalar_lea.vmem %s0, %s179
        %p181 = pneg %p50
        %p182 = pneg %p47
        %p183 = scmp.lt.s32.totalorder %s22, 7
        %s184 = scalar_select %p183, %s22, 7
        %s185 = smul.addr %s184, 8
        %s186 = smul.addr %s185, 4
        %s187 = scalar_lea.vmem %s1, %s186
        %p188 = pneg %p76
        %p189 = pneg %p73
        %p190 = scmp.lt.s32.totalorder %s22, 7
        %s191 = scalar_select %p190, %s22, 7
        %s192 = smul.addr %s191, 8
        %s193 = smul.addr %s192, 4
        %s194 = scalar_lea.vmem %s2, %s193
        %p195 = pneg %p102
        %p196 = pneg %p99
        %p197 = pneg %p128
        %p198 = pneg %p125
        %s199 = sand.u32 %s115, 1
        %s200 = scalar_lea.sflag [#allocation4], %s199
        %s201 = sand.u32 %s115, 1
        %s202 = smul.addr %s201, 8
        %s203 = scalar_lea.vmem [#allocation3], %s202
        %p204 = scmp.lt.s32.totalorder %s21, 1
        %s205 = scalar_select %p204, %s21, 1
        %s206 = smul.addr %s205, 4
        %s207 = scalar_lea.vmem %s0, %s206
        %p208 = scmp.lt.s32.totalorder %s22, 7
        %s209 = scalar_select %p208, %s22, 7
        %s210 = smul.addr %s209, 8
        %s211 = smul.addr %s210, 4
        %s212 = scalar_lea.vmem %s1, %s211
        %p213 = scmp.lt.s32.totalorder %s22, 7
        %s214 = scalar_select %p213, %s22, 7
        %s215 = smul.addr %s214, 8
        %s216 = smul.addr %s215, 4
        %s217 = scalar_lea.vmem %s2, %s216
        %p219 = scmp.eq.s32.totalorder %s22, 0
        // Predicated region
        $region33: #{attention_forward.1} parent=31 // pred_check
          %p220 = pneg %p219
        $region34: #{attention_forward.1} parent=31 // pred_check_branch
          %222 = sbr.rel (%p220) target = $region36
        $region35: #{attention_forward.1} parent=31 // pred_region
          %vm223 = vcmask 261120
          %224 = vst.msk [vmem:[#allocation2] sm:$0xff] %vm223, 0.0
        $region36: #{attention_forward.1} parent=31 // pred_fallthru
          _
        %v225 = vld [vmem:[%s207] sm:$0xf]
        %v226 = vld [vmem:[%s212] sm:$0xff]
        %v227 = vld [vmem:[%s212 + $0x8] sm:$0xff]
        %v228 = vld [vmem:[%s212 + $0x10] sm:$0xff]
        %v229 = vld [vmem:[%s212 + $0x18] sm:$0xff]
        %v234 = vunpack.c.l.b16 %v226
        %v235 = vunpack.c.h.b16 %v226
        %v236 = vunpack.c.l.b16 %v227
        %v237 = vunpack.c.h.b16 %v227
        %v238 = vunpack.c.l.b16 %v228
        %v239 = vunpack.c.h.b16 %v228
        %v240 = vunpack.c.l.b16 %v229
        %v241 = vunpack.c.h.b16 %v229
        %v242 = vpack.c.b16 %v236, %v234
        %v243 = vpack.c.b16 %v237, %v235
        %v244 = vpack.c.b16 %v240, %v238
        %v245 = vpack.c.b16 %v241, %v239
        %vm250 = vcmask 261120
        %v252 = vsel %vm250, %v225, 0
        %254 = vmatprep.subr.bf16.mxu0 %v243
        %255 = vmatpush1.bf16.msra.mxu0 %v242
        %256 = vmatprep.subr.bf16.mxu0 %v245
        %257 = vmatpush1.bf16.msra.mxu0 %v244
        %258 = vmatprep.subr.bf16.mxu0 0
        %259 = vmatpush1.bf16.msra.mxu0 0
        %260 = vmatprep.subr.bf16.mxu0 0
        %261 = vmatpush1.bf16.msra.mxu0 0
        %262 = vmatprep.subr.bf16.mxu0 0
        %263 = vmatpush1.bf16.msra.mxu0 0
        %264 = vmatprep.subr.bf16.mxu0 0
        %265 = vmatpush1.bf16.msra.mxu0 0
        %266 = vmatprep.subr.bf16.mxu0 0
        %267 = vmatpush1.bf16.msra.mxu0 0
        %268 = vmatprep.subr.bf16.mxu0 0
        %269 = vmatpush1.bf16.msra.mxu0 0
        %270 = vmatprep.subr.bf16.mxu0 0
        %271 = vmatpush1.bf16.msra.mxu0 0
        %272 = vmatprep.subr.bf16.mxu0 0
        %273 = vmatpush1.bf16.msra.mxu0 0
        %274 = vmatprep.subr.bf16.mxu0 0
        %275 = vmatpush1.bf16.msra.mxu0 0
        %276 = vmatprep.subr.bf16.mxu0 0
        %277 = vmatpush1.bf16.msra.mxu0 0
        %278 = vmatprep.subr.bf16.mxu0 0
        %279 = vmatpush1.bf16.msra.mxu0 0
        %280 = vmatprep.subr.bf16.mxu0 0
        %281 = vmatpush1.bf16.msra.mxu0 0
        %282 = vmatprep.subr.bf16.mxu0 0
        %283 = vmatpush1.bf16.msra.mxu0 0
        %284 = vmatprep.subr.bf16.mxu0 0
        %285 = vmatpush1.bf16.msra.mxu0 0
        %286 = vmatprep.mubr.bf16.mxu0 0
        %287 = vmatmul.mubr.bf16.gmra.mrb[0].mxu0 %v252
        %v288 = vpop.f32.mrb[0].mxu0
        %v289 = vadd.f32 0.0, %v288
        %v290 = vpop.f32.mrb[0].mxu0
        %v291 = vadd.f32 0.0, %v290
        %v292 = vpop.f32.mrb[0].mxu0
        %v293 = vpop.f32.mrb[0].mxu0
        %294 = vdwg.mxu0
        %v295 = vpack.c.bf16 %v289, %v289
        %v296 = vpack.c.bf16 %v291, %v291
        %298 = vrot.lane.b32.xlu0 %v295, 64
        %v299 = vpop.permute.xlu0 %298
        %vm300 = vcmask 523264
        %v302 = vsel %vm300, %v295, 0
        %v305 = vsel %vm300, %v299, 0
        %307 = vmatprep.subr.bf16.mxu0 0
        %308 = vmatpush1.bf16.xpose.msra.mxu0 %v305
        %309 = vmatprep.subr.bf16.mxu0 0
        %310 = vmatpush1.bf16.xpose.msra.mxu0 0
        %311 = vmatprep.subr.bf16.mxu0 0
        %312 = vmatpush1.bf16.xpose.msra.mxu0 0
        %313 = vmatprep.subr.bf16.mxu0 0
        %314 = vmatpush1.bf16.xpose.msra.mxu0 0
        %315 = vmatprep.subr.bf16.mxu0 0
        %316 = vmatpush1.bf16.xpose.msra.mxu0 0
        %317 = vmatprep.subr.bf16.mxu0 0
        %318 = vmatpush1.bf16.xpose.msra.mxu0 0
        %319 = vmatprep.subr.bf16.mxu0 0
        %320 = vmatpush1.bf16.xpose.msra.mxu0 0
        %321 = vmatprep.subr.bf16.mxu0 0
        %322 = vmatpush1.bf16.xpose.msra.mxu0 0
        %323 = vmatprep.subr.bf16.mxu0 0
        %324 = vmatpush1.bf16.xpose.msra.mxu0 0
        %325 = vmatprep.subr.bf16.mxu0 0
        %326 = vmatpush1.bf16.xpose.msra.mxu0 0
        %327 = vmatprep.subr.bf16.mxu0 0
        %328 = vmatpush1.bf16.xpose.msra.mxu0 0
        %329 = vmatprep.subr.bf16.mxu0 0
        %330 = vmatpush1.bf16.xpose.msra.mxu0 0
        %331 = vmatprep.subr.bf16.mxu0 0
        %332 = vmatpush1.bf16.xpose.msra.mxu0 0
        %333 = vmatprep.subr.bf16.mxu0 0
        %334 = vmatpush1.bf16.xpose.msra.mxu0 0
        %335 = vmatprep.subr.bf16.mxu0 0
        %336 = vmatpush1.bf16.xpose.msra.mxu0 0
        %337 = vmatprep.subr.bf16.mxu0 0
        %338 = vmatpush1.bf16.xpose.msra.mxu0 0
        %339 = vmatprep.mubr.bf16.mxu0 0
        %340 = vmatmul.mubr.bf16.gmra.mrb[0].mxu0 %v302
        %v341 = vpop.f32.mrb[0].mxu0
        %v342 = vadd.f32 0.0, %v341
        %v343 = vpop.f32.mrb[0].mxu0
        %v344 = vpop.f32.mrb[0].mxu0
        %v345 = vpop.f32.mrb[0].mxu0
        %346 = vdwg.mxu0
        %vm347 = vcmask 64512
        %v348 = vsel %vm347, %v342, -inf
        %349 = vmax.xlane.f32.xlu0 %v348
        %v350 = vpop.xlane.xlu0 %349
        %v351 = vsub.f32 %v342, %v350
        %v352 = vmul.f32 %v351, 1.442695
        %v353 = vpow.pop %v352
        %v354 = vsel %vm347, %v353, 0.0
        %355 = vadd.xlane.f32.xlu0 %v354
        %v356 = vpop.xlane.xlu0 %355
        %v357 = vrcp.pop %v356
        %v358 = vmul.f32 %v353, %v357
        %v359 = vpack.c.bf16 %v358, %v358
        %v361 = vsel %vm347, %v359, 0
        %vm363 = vcmask 1043456
        %v365 = vsel %vm363, %v296, 0
        %367 = vmatprep.subr.bf16.mxu0 0
        %368 = vmatpush1.bf16.msra.mxu0 %v365
        %369 = vmatprep.subr.bf16.mxu0 0
        %370 = vmatpush1.bf16.msra.mxu0 0
        %371 = vmatprep.subr.bf16.mxu0 0
        %372 = vmatpush1.bf16.msra.mxu0 0
        %373 = vmatprep.subr.bf16.mxu0 0
        %374 = vmatpush1.bf16.msra.mxu0 0
        %375 = vmatprep.subr.bf16.mxu0 0
        %376 = vmatpush1.bf16.msra.mxu0 0
        %377 = vmatprep.subr.bf16.mxu0 0
        %378 = vmatpush1.bf16.msra.mxu0 0
        %379 = vmatprep.subr.bf16.mxu0 0
        %380 = vmatpush1.bf16.msra.mxu0 0
        %381 = vmatprep.subr.bf16.mxu0 0
        %382 = vmatpush1.bf16.msra.mxu0 0
        %383 = vmatprep.subr.bf16.mxu0 0
        %384 = vmatpush1.bf16.msra.mxu0 0
        %385 = vmatprep.subr.bf16.mxu0 0
        %386 = vmatpush1.bf16.msra.mxu0 0
        %387 = vmatprep.subr.bf16.mxu0 0
        %388 = vmatpush1.bf16.msra.mxu0 0
        %389 = vmatprep.subr.bf16.mxu0 0
        %390 = vmatpush1.bf16.msra.mxu0 0
        %391 = vmatprep.subr.bf16.mxu0 0
        %392 = vmatpush1.bf16.msra.mxu0 0
        %393 = vmatprep.subr.bf16.mxu0 0
        %394 = vmatpush1.bf16.msra.mxu0 0
        %395 = vmatprep.subr.bf16.mxu0 0
        %396 = vmatpush1.bf16.msra.mxu0 0
        %397 = vmatprep.subr.bf16.mxu0 0
        %398 = vmatpush1.bf16.msra.mxu0 0
        %399 = vmatprep.mubr.bf16.mxu0 0
        %400 = vmatmul.mubr.bf16.gmra.mrb[0].mxu0 %v361
        %v401 = vpop.f32.mrb[0].mxu0
        %v402 = vadd.f32 0.0, %v401
        %v403 = vpop.f32.mrb[0].mxu0
        %v404 = vpop.f32.mrb[0].mxu0
        %v405 = vpop.f32.mrb[0].mxu0
        %406 = vdwg.mxu0
        %v407 = vpack.c.bf16 %v402, %v402
        %v408 = vld [vmem:[#allocation2] sm:$0xff]
        %v409 = vld [vmem:[%s217] sm:$0xf]
        %v410 = vld [vmem:[%s217 + $0x4] sm:$0xf]
        %v411 = vld [vmem:[%s217 + $0x8] sm:$0xf]
        %v412 = vld [vmem:[%s217 + $0xc] sm:$0xf]
        %v413 = vld [vmem:[%s217 + $0x10] sm:$0xf]
        %v414 = vld [vmem:[%s217 + $0x14] sm:$0xf]
        %v415 = vld [vmem:[%s217 + $0x18] sm:$0xf]
        %v416 = vld [vmem:[%s217 + $0x1c] sm:$0xf]
        %v425 = vunpack.c.l.b16 %v409
        %v426 = vunpack.c.l.b16 %v410
        %v427 = vunpack.c.l.b16 %v411
        %v428 = vunpack.c.l.b16 %v412
        %v429 = vunpack.c.l.b16 %v413
        %v430 = vunpack.c.l.b16 %v414
        %v431 = vunpack.c.l.b16 %v415
        %v432 = vunpack.c.l.b16 %v416
        %v433 = vpack.c.b16 %v426, %v425
        %v434 = vpack.c.b16 %v428, %v427
        %v435 = vpack.c.b16 %v430, %v429
        %v436 = vpack.c.b16 %v432, %v431
        %v442 = vsel %vm300, %v407, 0
        %444 = vmatprep.subr.bf16.mxu0 0
        %445 = vmatpush1.bf16.msra.mxu0 %v433
        %446 = vmatprep.subr.bf16.mxu0 0
        %447 = vmatpush1.bf16.msra.mxu0 %v434
        %448 = vmatprep.subr.bf16.mxu0 0
        %449 = vmatpush1.bf16.msra.mxu0 %v435
        %450 = vmatprep.subr.bf16.mxu0 0
        %451 = vmatpush1.bf16.msra.mxu0 %v436
        %452 = vmatprep.subr.bf16.mxu0 0
        %453 = vmatpush1.bf16.msra.mxu0 0
        %454 = vmatprep.subr.bf16.mxu0 0
        %455 = vmatpush1.bf16.msra.mxu0 0
        %456 = vmatprep.subr.bf16.mxu0 0
        %457 = vmatpush1.bf16.msra.mxu0 0
        %458 = vmatprep.subr.bf16.mxu0 0
        %459 = vmatpush1.bf16.msra.mxu0 0
        %460 = vmatprep.subr.bf16.mxu0 0
        %461 = vmatpush1.bf16.msra.mxu0 0
        %462 = vmatprep.subr.bf16.mxu0 0
        %463 = vmatpush1.bf16.msra.mxu0 0
        %464 = vmatprep.subr.bf16.mxu0 0
        %465 = vmatpush1.bf16.msra.mxu0 0
        %466 = vmatprep.subr.bf16.mxu0 0
        %467 = vmatpush1.bf16.msra.mxu0 0
        %468 = vmatprep.subr.bf16.mxu0 0
        %469 = vmatpush1.bf16.msra.mxu0 0
        %470 = vmatprep.subr.bf16.mxu0 0
        %471 = vmatpush1.bf16.msra.mxu0 0
        %472 = vmatprep.subr.bf16.mxu0 0
        %473 = vmatpush1.bf16.msra.mxu0 0
        %474 = vmatprep.subr.bf16.mxu0 0
        %475 = vmatpush1.bf16.msra.mxu0 0
        %476 = vmatprep.mubr.bf16.mxu0 0
        %477 = vmatmul.mubr.bf16.gmra.mrb[0].mxu0 %v442
        %v478 = vpop.f32.mrb[0].mxu0
        %v479 = vadd.f32 0.0, %v478
        %v480 = vpop.f32.mrb[0].mxu0
        %v481 = vpop.f32.mrb[0].mxu0
        %v482 = vpop.f32.mrb[0].mxu0
        %483 = vdwg.mxu0
        %v484 = vadd.f32 %v408, %v479
        %485 = vst.msk [vmem:[#allocation2] sm:$0xff] %vm250, %v484
        %p486 = scmp.eq.s32.totalorder %s22, 7
        // Predicated region
        $region37: #{attention_forward.1} parent=31 // pred_check
          %p487 = pneg %p486
        $region38: #{attention_forward.1} parent=31 // pred_check_branch
          %489 = sbr.rel (%p487) target = $region40
        $region39: #{attention_forward.1} parent=31 // pred_region
          %v490 = vld [vmem:[#allocation2] sm:$0xff]
          %491 = vst.msk [vmem:[%s203] sm:$0xff] %vm250, %v490
        $region40: #{attention_forward.1} parent=31 // pred_fallthru
          _
        %s492 = sand.u32 %s115, 1
        %s493 = scalar_lea.sflag [#allocation4], %s492
        %s494 = sand.u32 %s115, 1
        %s495 = smul.addr %s494, 8
        %s496 = scalar_lea.vmem [#allocation3], %s495
        // Predicated region
        $region41: #{attention_forward.1} parent=31 // pred_check
          %p497 = pneg %p125
        $region42: #{attention_forward.1} parent=31 // pred_check_branch
          %499 = sbr.rel (%p497) target = $region44
        $region43: #{attention_forward.1} parent=31 // pred_region
          %s501 = ssub.s32 128, 128
          %502 = vsyncadd %s493, %s501
          %s503 = smul.addr %s21, 128
          %s504 = scalar_lea.hbm %s3, %s503
          %s506 = sshll.u32 %s496, 4
          %s507 = int_to_ptr.vmem [resolvable:$true] %s506
          %509 = dma.vmem_to_hbm [thread:$0]  %s507, 128, %s504, %s493
        $region44: #{attention_forward.1} parent=31 // pred_fallthru
          _
      $region32: #{attention_forward.1} parent=5 // pred_fallthru
        _
      %p510 = scmp.le.s32.totalorder 2, %s12
      // Predicated region
      $region45: #{attention_forward.1} parent=5 // pred_check
        %p511 = pneg %p510
      $region46: #{attention_forward.1} parent=5 // pred_check_branch
        %513 = sbr.rel (%p511) target = $region48
      $region47: #{attention_forward.1} parent=5 // pred_region
        %s514 = ssub.s32 %s12, 2
        // Predicated region
        $region49: #{attention_forward.1} parent=47 // pred_check
          %p515 = pneg %p131
        $region50: #{attention_forward.1} parent=47 // pred_check_branch
          %517 = sbr.rel (%p515) target = $region52
        $region51: #{attention_forward.1} parent=47 // pred_region
          %s518 = sand.u32 %s116, 1
          %s519 = scalar_lea.sflag [#allocation4], %s518
          %s520 = sand.u32 %s116, 1
          %s521 = smul.addr %s520, 8
          %s522 = scalar_lea.vmem [#allocation3], %s521
          %523 = dma.done %s519, 128
        $region52: #{attention_forward.1} parent=47 // pred_fallthru
          _
      $region48: #{attention_forward.1} parent=5 // pred_fallthru
        _
    $region6: #{attention_forward.1} parent=1 // loop_footer
      %s16 = sadd.s32 1, %s12
    $region7: #{attention_forward.1} parent=1 // loop_footer_branch
      %11 = sbr.rel target = $region3
    $region8: #{attention_forward.1} parent=1 // loop_exit
      _
    %524 = vsyncpa [#allocation4], 1
    %s525 = scalar_lea.sflag [#allocation4], 1
    %526 = vsyncpa %s525, 1

</llo_original>
